<compile_context>
chip_gen: v6e
topology: v6e:2x2x1
jax: 0.10.0
libtpu: 0.0.40
codegen_flags: <defaults>
</compile_context>

<pallas_src>
import jax
import jax.numpy as jnp
from jax.experimental import pallas as pl
from jax.experimental.pallas import tpu as pltpu


def _round_up(x, m):
    return ((x + m - 1) // m) * m


def _resident_spec(shape, single_buffer):
    """Constant-index (VMEM-resident) BlockSpec; optionally single-buffered."""
    idx = lambda i: (0, 0)
    if single_buffer and hasattr(pl, "Buffered"):
        try:
            return pl.BlockSpec(shape, idx, pipeline_mode=pl.Buffered(1))
        except TypeError:
            pass  # older API: fall back to default buffering
    return pl.BlockSpec(shape, idx)


def _make_kernel(num_layers, input_size, pair_sliced, compute_dtype,
                 batch, batch_tile, emit_logits):
    def kernel(*refs):
        # refs: x, (w0, b0), ..., (w{L-1}, b{L-1}), labels, [logits_out], stats_out
        x_ref = refs[0]
        y_ref = refs[1 + 2 * num_layers]
        out0 = 2 + 2 * num_layers
        logits_ref = refs[out0] if emit_logits else None
        stats_ref = refs[out0 + 1] if emit_logits else refs[out0]

        # Pair element 0: either already selected by the x BlockSpec (pair_sliced) or
        # sliced out of the full-pair VMEM tile (unaligned fallback).
        h = x_ref[...] if pair_sliced else x_ref[:, :input_size]
        if h.dtype != compute_dtype:
            h = h.astype(compute_dtype)

        for li in range(num_layers):
            w = refs[1 + 2 * li][...]                       # compute_dtype (bf16 or f32)
            b = refs[2 + 2 * li][...]                       # f32, shape (1, N_pad)
            z = jnp.dot(h, w, preferred_element_type=jnp.float32) + b   # f32 accumulate
            if li != num_layers - 1:
                h = jnp.maximum(z, 0.0).astype(compute_dtype)   # fused bias+ReLU in f32
            else:
                h = z                                            # final logits stay f32
        logits = h                                               # [TB, c_pad] f32

        if emit_logits:
            logits_ref[...] = logits.astype(logits_ref.dtype)

        labels = y_ref[...]                                      # [TB, 1] int32
        col = jax.lax.broadcasted_iota(jnp.int32, logits.shape, 1)
        onehot = col == labels                                   # in-kernel one-hot

        # nn.CrossEntropyLoss per-row loss.
        m = jnp.max(logits, axis=-1, keepdims=True)
        lse = m + jnp.log(jnp.sum(jnp.exp(logits - m), axis=-1, keepdims=True))
        true_logit = jnp.sum(jnp.where(onehot, logits, 0.0), axis=-1, keepdims=True)
        loss_rows = lse - true_logit                             # [TB, 1]

        # top-1 accuracy with argmax first-tied-index semantics.
        npad = jnp.int32(logits.shape[-1])
        pred = jnp.min(jnp.where(logits == m, col, npad), axis=-1, keepdims=True)
        corr_rows = pred == labels                               # [TB, 1] bool

        # Mask rows beyond the real batch (ragged last tile handled here, no HBM pad).
        row = jax.lax.broadcasted_iota(jnp.int32, (batch_tile, 1), 0)
        valid = (pl.program_id(0) * batch_tile + row) < batch

        loss_sum = jnp.sum(jnp.where(valid, loss_rows, 0.0))
        corr_sum = jnp.sum(jnp.where(valid & corr_rows, 1.0, 0.0))
        n_valid = jnp.sum(valid.astype(jnp.float32))

        # One lane-dense (8,128) stats vreg per tile: [0,0]=sum loss, [0,1]=#correct,
        # [0,2]=#valid. Replaces narrow per-row [TB,1] masked stores.
        sub = jax.lax.broadcasted_iota(jnp.int32, (8, 128), 0)
        lane = jax.lax.broadcasted_iota(jnp.int32, (8, 128), 1)
        first = sub == 0
        tile = jnp.where(first & (lane == 0), loss_sum,
                         jnp.where(first & (lane == 1), corr_sum,
                                   jnp.where(first & (lane == 2), n_valid, 0.0)))
        stats_ref[...] = tile.reshape(1, 8, 128)

    return kernel


def vicreg_ann_forward(x, y, weights, biases, num_classes, *,
                       batch_tile=None, compute_dtype=jnp.float32,
                       return_logits=False, weight_buffer_count=None):
    """forwardBatchStandard inference path.

    x: [B, 2, D] (VICReg sample pairs; only pair element 0 is used). Any float dtype;
       it is consumed natively (pass bf16 to halve x DMA on the bf16 compute path).
    y: [B] int labels.
    weights[i]: [in_i, out_i] (transposed vs torch nn.Linear [out, in]); biases[i]: [out_i].
    Returns (loss, accuracy) or (loss, accuracy, logits[B, num_classes]) if return_logits.
    """
    batch, two, input_size = x.shape
    assert two == 2
    num_layers = len(weights)
    c = num_classes
    c_pad = _round_up(max(c, 128), 128)              # lane-dense classifier width

    sublane = 16 if jnp.dtype(compute_dtype) == jnp.dtype(jnp.bfloat16) else 8
    if batch_tile is None:
        if batch <= 32:
            batch_tile = _round_up(max(batch, sublane), sublane)      # single tile
        else:
            # >=2 tiles so v7x's second TensorCore gets work; keep tiles large.
            batch_tile = min(512, _round_up(-(-batch // 2), sublane))
    assert batch_tile % 8 == 0
    num_tiles = -(-batch // batch_tile)              # ragged last tile masked in-kernel

    # x: free reshape to [B, 2*D]; pair element 0 occupies columns [0, D).
    pair_sliced = (input_size % 128 == 0)            # DMA only pair 0 when lane-aligned
    x_cols = input_size if pair_sliced else 2 * input_size
    x2d = x.reshape(batch, 2 * input_size)           # no copy, native dtype
    y2d = y.astype(jnp.int32).reshape(batch, 1)

    # Pad every layer width to a 128 multiple (zeros are inert through matmul+ReLU);
    # padded classifier columns get a -1e9 f32 bias so LSE/argmax ignore them.
    neg = jnp.float32(-1e9)
    params, widths = [], []
    prev_w = input_size                              # first K matches unpadded x features
    for li, (w, b) in enumerate(zip(weights, biases)):
        k_orig, n_orig = w.shape
        n_pad = c_pad if li == num_layers - 1 else _round_up(n_orig, 128)
        w = jnp.asarray(w, jnp.float32)
        b = jnp.asarray(b, jnp.float32)
        w = jnp.pad(w, ((0, prev_w - k_orig), (0, n_pad - n_orig)))
        if li == num_layers - 1:
            b = jnp.concatenate([b, jnp.full((n_pad - n_orig,), neg, jnp.float32)])
        else:
            b = jnp.pad(b, (0, n_pad - n_orig))
        params += [w.astype(compute_dtype), b.reshape(1, n_pad)]   # bias stays f32
        widths.append(n_pad)
        prev_w = n_pad

    weight_bytes = sum(int(p.size) * p.dtype.itemsize for p in params)
    if weight_buffer_count is None:
        single_buf = weight_bytes > (8 << 20)        # single-buffer large resident weights
    else:
        single_buf = weight_buffer_count == 1
    param_specs = [_resident_spec(p.shape, single_buf) for p in params]

    in_specs = ([pl.BlockSpec((batch_tile, x_cols), lambda i: (i, 0))]
                + param_specs
                + [pl.BlockSpec((batch_tile, 1), lambda i: (i, 0))])

    stats_shape = jax.ShapeDtypeStruct((num_tiles, 8, 128), jnp.float32)
    stats_spec = pl.BlockSpec((1, 8, 128), lambda i: (i, 0, 0))
    if return_logits:
        out_shape = (jax.ShapeDtypeStruct((batch, c_pad), jnp.float32), stats_shape)
        out_specs = (pl.BlockSpec((batch_tile, c_pad), lambda i: (i, 0)), stats_spec)
    else:
        out_shape = (stats_shape,)
        out_specs = (stats_spec,)

    # VMEM budget: resident weights (single or double buffered), double-buffered per-tile
    # streams, intermediate activations, plus headroom; clamped to the device capacity
    # (64 MiB on v7x) with 15% margin.
    compute_isize = jnp.dtype(compute_dtype).itemsize
    x_isize = jnp.dtype(x2d.dtype).itemsize
    stream_bytes = (batch_tile * x_cols * x_isize + batch_tile * 4
                    + (batch_tile * c_pad * 4 if return_logits else 0)
                    + 8 * 128 * 4)
    max_w = max(widths + [x_cols])
    act_bytes = 2 * batch_tile * max_w * (4 + compute_isize)
    wbuf = 1 if single_buf else 2
    vmem_need = wbuf * weight_bytes + 2 * stream_bytes + act_bytes + (4 << 20)
    try:
        cap = int(pltpu.get_tpu_info().vmem_capacity_bytes)
    except Exception:
        cap = 64 << 20                                # conservative (v7x) fallback
    vmem_limit = int(min(max(vmem_need, 32 << 20), int(0.85 * cap)))

    outs = pl.pallas_call(
        _make_kernel(num_layers, input_size, pair_sliced, compute_dtype,
                     batch, batch_tile, return_logits),
        grid=(num_tiles,),
        in_specs=in_specs,
        out_specs=out_specs,
        out_shape=out_shape,
        compiler_params=pltpu.CompilerParams(
            dimension_semantics=("parallel",),        # per-tile outputs are independent
            vmem_limit_bytes=vmem_limit),
    )(x2d, *params, y2d)

    if return_logits:
        logits_p, stats = outs
    else:
        (stats,) = outs
    n = stats[:, 0, 2].sum()
    loss = stats[:, 0, 0].sum() / n
    accuracy = stats[:, 0, 1].sum() / n
    if return_logits:
        return loss, accuracy, logits_p[:, :c]
    return loss, accuracy


def reference_forward(x, y, weights, biases, num_classes):
    h = x[:, 0]
    for li, (w, b) in enumerate(zip(weights, biases)):
        h = h @ w + b
        if li != len(weights) - 1:
            h = jnp.maximum(h, 0.0)
    logits = h
    lse = jax.scipy.special.logsumexp(logits, axis=-1)
    loss = jnp.mean(lse - logits[jnp.arange(h.shape[0]), y])
    acc = jnp.mean((jnp.argmax(logits, axis=-1) == y).astype(jnp.float32))
    return logits, loss, acc


def _init_mlp(key, sizes):
    weights, biases = [], []
    for li in range(len(sizes) - 1):
        key, kw, kb = jax.random.split(key, 3)
        fan_in, fan_out = sizes[li], sizes[li + 1]
        bound = 1.0 / (fan_in ** 0.5)
        w = jax.random.uniform(kw, (fan_in, fan_out), jnp.float32, -bound, bound)
        b = jax.random.uniform(kb, (fan_out,), jnp.float32, -bound, bound)
        weights.append(jnp.abs(w))          # ANNpt_linearSublayers.weightsSetPositiveModel
        biases.append(b)
    return key, weights, biases


if __name__ == "__main__":
    key = jax.random.PRNGKey(0)

    # --- Config consistent with the module: numberOfLayers=3, input=16, hidden=32, out=8.
    batch, input_size, hidden, classes, num_layers = 24, 16, 32, 8, 3
    key, weights, biases = _init_mlp(key, [input_size] + [hidden] * (num_layers - 1) + [classes])
    key, kx, ky = jax.random.split(key, 3)
    x = jax.random.normal(kx, (batch, 2, input_size), jnp.float32)   # VICReg sample pairs
    y = jax.random.randint(ky, (batch,), 0, classes, jnp.int32)
    ref_logits, ref_loss, ref_acc = reference_forward(x, y, weights, biases, classes)

    # A) f32, 3 batch tiles of 8 -> exercises the parallel grid axis + logits output.
    loss, acc, logits = jax.block_until_ready(
        vicreg_ann_forward(x, y, weights, biases, classes,
                           batch_tile=8, return_logits=True))
    assert jnp.allclose(logits, ref_logits, atol=1e-4, rtol=1e-4)
    assert jnp.allclose(loss, ref_loss, atol=1e-4, rtol=1e-4)
    assert jnp.allclose(acc, ref_acc, atol=1e-6)

    # B) Ragged batch (13 rows, tile=8) -> in-kernel masking of the last tile, no HBM pad.
    xb, yb = x[:13], y[:13]
    rl, rloss, racc = reference_forward(xb, yb, weights, biases, classes)
    loss2, acc2, l2 = jax.block_until_ready(
        vicreg_ann_forward(xb, yb, weights, biases, classes,
                           batch_tile=8, return_logits=True))
    assert jnp.allclose(l2, rl, atol=1e-4, rtol=1e-4)
    assert jnp.allclose(loss2, rloss, atol=1e-4, rtol=1e-4)
    assert jnp.allclose(acc2, racc, atol=1e-6)

    # C) Default path (auto tile, loss/accuracy only -> no logits writeback).
    loss3, acc3 = jax.block_until_ready(
        vicreg_ann_forward(x, y, weights, biases, classes))
    assert jnp.allclose(loss3, ref_loss, atol=1e-4, rtol=1e-4)
    assert jnp.allclose(acc3, ref_acc, atol=1e-6)

    # D) Lane-aligned input (D=128) -> pair element dropped at DMA time (half-width x block).
    b2, d2, h2, c2 = 64, 128, 256, 10
    key, w2, bs2 = _init_mlp(key, [d2, h2, h2, c2])
    key, kx2, ky2 = jax.random.split(key, 3)
    x2 = jax.random.normal(kx2, (b2, 2, d2), jnp.float32)
    y2 = jax.random.randint(ky2, (b2,), 0, c2, jnp.int32)
    r2_logits, r2_loss, r2_acc = reference_forward(x2, y2, w2, bs2, c2)
    loss4, acc4, l4 = jax.block_until_ready(
        vicreg_ann_forward(x2, y2, w2, bs2, c2, return_logits=True))
    assert jnp.allclose(l4, r2_logits, atol=1e-2, rtol=1e-3)
    assert jnp.allclose(loss4, r2_loss, atol=1e-3, rtol=1e-3)
    assert jnp.allclose(acc4, r2_acc, atol=1e-6)

    # E) bf16 MXU compute path (f32 accumulate); loose check.
    loss5, acc5 = jax.block_until_ready(
        vicreg_ann_forward(x, y, weights, biases, classes,
                           batch_tile=16, compute_dtype=jnp.bfloat16))
    assert jnp.allclose(loss5, ref_loss, atol=0.1, rtol=0.1)

    print("KERNEL_OK")
</pallas_src>

<mosaic_0001>
module attributes {stable_mosaic.version = 11 : i64} {
  func.func @kernel(%arg0: i32, %arg1: memref<8x32xf32, #tpu.memory_space<vmem>>, %arg2: memref<16x128xf32, #tpu.memory_space<vmem>>, %arg3: memref<1x128xf32, #tpu.memory_space<vmem>>, %arg4: memref<128x128xf32, #tpu.memory_space<vmem>>, %arg5: memref<1x128xf32, #tpu.memory_space<vmem>>, %arg6: memref<128x128xf32, #tpu.memory_space<vmem>>, %arg7: memref<1x128xf32, #tpu.memory_space<vmem>>, %arg8: memref<8x1xi32, #tpu.memory_space<vmem>>, %arg9: memref<8x128xf32, #tpu.memory_space<vmem>>, %arg10: memref<1x8x128xf32, #tpu.memory_space<vmem>>) attributes {dimension_semantics = [#tpu.dimension_semantics<parallel>], iteration_bounds = array<i64: 3>, scalar_prefetch = 0 : i64, scratch_operands = 0 : i64, tpu.core_type = #tpu.core_type<tc>, window_params = [{transform_indices = @transform_0, window_bounds = array<i64: 8, 32>}, {pipeline_mode = #tpu.pipeline_mode<synchronous>, transform_indices = @transform_1, window_bounds = array<i64: 16, 128>}, {pipeline_mode = #tpu.pipeline_mode<synchronous>, transform_indices = @transform_2, window_bounds = array<i64: 1, 128>}, {pipeline_mode = #tpu.pipeline_mode<synchronous>, transform_indices = @transform_3, window_bounds = array<i64: 128, 128>}, {pipeline_mode = #tpu.pipeline_mode<synchronous>, transform_indices = @transform_4, window_bounds = array<i64: 1, 128>}, {pipeline_mode = #tpu.pipeline_mode<synchronous>, transform_indices = @transform_5, window_bounds = array<i64: 128, 128>}, {pipeline_mode = #tpu.pipeline_mode<synchronous>, transform_indices = @transform_6, window_bounds = array<i64: 1, 128>}, {transform_indices = @transform_7, window_bounds = array<i64: 8, 1>}, {transform_indices = @transform_8, window_bounds = array<i64: 8, 128>}, {transform_indices = @transform_9, window_bounds = array<i64: 1, 8, 128>}]} {
    %c0 = arith.constant 0 : index
    %c0_0 = arith.constant 0 : index
    %0 = vector.load %arg1[%c0, %c0_0] : memref<8x32xf32, #tpu.memory_space<vmem>>, vector<8x16xf32>
    %c0_1 = arith.constant 0 : index
    %c0_2 = arith.constant 0 : index
    %1 = vector.load %arg2[%c0_1, %c0_2] : memref<16x128xf32, #tpu.memory_space<vmem>>, vector<16x128xf32>
    %c0_3 = arith.constant 0 : index
    %c0_4 = arith.constant 0 : index
    %2 = vector.load %arg3[%c0_3, %c0_4] : memref<1x128xf32, #tpu.memory_space<vmem>>, vector<1x128xf32>
    %cst = arith.constant dense<0.000000e+00> : vector<8x128xf32>
    %3 = tpu.matmul %0, %1, %cst {dimension_numbers = #tpu.dot_dimension_numbers<[1], [0], [0], [1], [0, 0, 1, 1], [], []>} : vector<8x16xf32>, vector<16x128xf32>, vector<8x128xf32> -> vector<8x128xf32>
    %4 = vector.broadcast %2 : vector<1x128xf32> to vector<8x128xf32>
    %5 = arith.addf %3, %4 : vector<8x128xf32>
    %cst_5 = arith.constant 0.000000e+00 : f32
    %6 = vector.broadcast %cst_5 : f32 to vector<8x128xf32>
    %7 = arith.maximumf %5, %6 : vector<8x128xf32>
    %c0_6 = arith.constant 0 : index
    %c0_7 = arith.constant 0 : index
    %8 = vector.load %arg4[%c0_6, %c0_7] : memref<128x128xf32, #tpu.memory_space<vmem>>, vector<128x128xf32>
    %c0_8 = arith.constant 0 : index
    %c0_9 = arith.constant 0 : index
    %9 = vector.load %arg5[%c0_8, %c0_9] : memref<1x128xf32, #tpu.memory_space<vmem>>, vector<1x128xf32>
    %cst_10 = arith.constant dense<0.000000e+00> : vector<8x128xf32>
    %10 = tpu.matmul %7, %8, %cst_10 {dimension_numbers = #tpu.dot_dimension_numbers<[1], [0], [0], [1], [0, 0, 1, 1], [], []>} : vector<8x128xf32>, vector<128x128xf32>, vector<8x128xf32> -> vector<8x128xf32>
    %11 = vector.broadcast %9 : vector<1x128xf32> to vector<8x128xf32>
    %12 = arith.addf %10, %11 : vector<8x128xf32>
    %cst_11 = arith.constant 0.000000e+00 : f32
    %13 = vector.broadcast %cst_11 : f32 to vector<8x128xf32>
    %14 = arith.maximumf %12, %13 : vector<8x128xf32>
    %c0_12 = arith.constant 0 : index
    %c0_13 = arith.constant 0 : index
    %15 = vector.load %arg6[%c0_12, %c0_13] : memref<128x128xf32, #tpu.memory_space<vmem>>, vector<128x128xf32>
    %c0_14 = arith.constant 0 : index
    %c0_15 = arith.constant 0 : index
    %16 = vector.load %arg7[%c0_14, %c0_15] : memref<1x128xf32, #tpu.memory_space<vmem>>, vector<1x128xf32>
    %cst_16 = arith.constant dense<0.000000e+00> : vector<8x128xf32>
    %17 = tpu.matmul %14, %15, %cst_16 {dimension_numbers = #tpu.dot_dimension_numbers<[1], [0], [0], [1], [0, 0, 1, 1], [], []>} : vector<8x128xf32>, vector<128x128xf32>, vector<8x128xf32> -> vector<8x128xf32>
    %18 = vector.broadcast %16 : vector<1x128xf32> to vector<8x128xf32>
    %19 = arith.addf %17, %18 : vector<8x128xf32>
    %c0_17 = arith.constant 0 : index
    %c0_18 = arith.constant 0 : index
    %20 = vector.load %arg9[%c0_17, %c0_18] : memref<8x128xf32, #tpu.memory_space<vmem>>, vector<8x128xf32>
    tpu.vector_store %arg9[%c0_17, %c0_18], %19 {strides = array<i32>} : memref<8x128xf32, #tpu.memory_space<vmem>>, vector<8x128xf32>,
    %c0_19 = arith.constant 0 : index
    %c0_20 = arith.constant 0 : index
    %21 = vector.load %arg8[%c0_19, %c0_20] : memref<8x1xi32, #tpu.memory_space<vmem>>, vector<8x1xi32>
    %22 = tpu.iota {dimensions = array<i32: 1>} : vector<8x128xi32>
    %23 = vector.broadcast %21 : vector<8x1xi32> to vector<8x128xi32>
    %24 = arith.cmpi eq, %22, %23 : vector<8x128xi32>
    %cst_21 = arith.constant dense<0xFF800000> : vector<8xf32>
    %25 = vector.multi_reduction <maximumf>, %19, %cst_21 [1] : vector<8x128xf32> to vector<8xf32>
    %26 = vector.shape_cast %25 : vector<8xf32> to vector<8x1xf32>
    %27 = vector.broadcast %26 : vector<8x1xf32> to vector<8x128xf32>
    %28 = arith.subf %19, %27 : vector<8x128xf32>
    %29 = math.exp %28 : vector<8x128xf32>
    %cst_22 = arith.constant dense<0.000000e+00> : vector<8xf32>
    %30 = vector.multi_reduction <add>, %29, %cst_22 [1] : vector<8x128xf32> to vector<8xf32>
    %31 = vector.shape_cast %30 : vector<8xf32> to vector<8x1xf32>
    %32 = math.log %31 : vector<8x1xf32>
    %33 = arith.addf %26, %32 : vector<8x1xf32>
    %cst_23 = arith.constant 0.000000e+00 : f32
    %34 = vector.broadcast %cst_23 : f32 to vector<8x128xf32>
    %35 = arith.select %24, %19, %34 : vector<8x128xi1>, vector<8x128xf32>
    %cst_24 = arith.constant dense<0.000000e+00> : vector<8xf32>
    %36 = vector.multi_reduction <add>, %35, %cst_24 [1] : vector<8x128xf32> to vector<8xf32>
    %37 = vector.shape_cast %36 : vector<8xf32> to vector<8x1xf32>
    %38 = arith.subf %33, %37 : vector<8x1xf32>
    %39 = vector.broadcast %26 : vector<8x1xf32> to vector<8x128xf32>
    %40 = arith.cmpf oeq, %19, %39 : vector<8x128xf32>
    %c128_i32 = arith.constant 128 : i32
    %41 = vector.broadcast %c128_i32 : i32 to vector<8x128xi32>
    %42 = arith.select %40, %22, %41 : vector<8x128xi1>, vector<8x128xi32>
    %cst_25 = arith.constant dense<2147483647> : vector<8xi32>
    %43 = vector.multi_reduction <minsi>, %42, %cst_25 [1] : vector<8x128xi32> to vector<8xi32>
    %44 = vector.shape_cast %43 : vector<8xi32> to vector<8x1xi32>
    %45 = arith.cmpi eq, %44, %21 : vector<8x1xi32>
    %46 = tpu.iota {dimensions = array<i32: 0>} : vector<8x1xi32>
    %c8_i32 = arith.constant 8 : i32
    %47 = arith.muli %arg0, %c8_i32 : i32
    %48 = vector.broadcast %47 : i32 to vector<8x1xi32>
    %49 = arith.addi %48, %46 : vector<8x1xi32>
    %c24_i32 = arith.constant 24 : i32
    %50 = vector.broadcast %c24_i32 : i32 to vector<8x1xi32>
    %51 = arith.cmpi slt, %49, %50 : vector<8x1xi32>
    %cst_26 = arith.constant 0.000000e+00 : f32
    %52 = vector.broadcast %cst_26 : f32 to vector<8x1xf32>
    %53 = arith.select %51, %38, %52 : vector<8x1xi1>, vector<8x1xf32>
    %54 = vector.shape_cast %53 : vector<8x1xf32> to vector<1x8x1xf32>
    %cst_27 = arith.constant dense<0.000000e+00> : vector<1xf32>
    %55 = vector.multi_reduction <add>, %54, %cst_27 [1, 2] : vector<1x8x1xf32> to vector<1xf32>
    %56 = vector.shape_cast %55 : vector<1xf32> to vector<1x1x1xf32>
    %57 = vector.extract %56[0, 0, 0] : f32 from vector<1x1x1xf32>
    %58 = arith.andi %51, %45 : vector<8x1xi1>
    %cst_28 = arith.constant 1.000000e+00 : f32
    %cst_29 = arith.constant 0.000000e+00 : f32
    %59 = vector.broadcast %cst_28 : f32 to vector<8x1xf32>
    %60 = vector.broadcast %cst_29 : f32 to vector<8x1xf32>
    %61 = arith.select %58, %59, %60 : vector<8x1xi1>, vector<8x1xf32>
    %62 = vector.shape_cast %61 : vector<8x1xf32> to vector<1x8x1xf32>
    %cst_30 = arith.constant dense<0.000000e+00> : vector<1xf32>
    %63 = vector.multi_reduction <add>, %62, %cst_30 [1, 2] : vector<1x8x1xf32> to vector<1xf32>
    %64 = vector.shape_cast %63 : vector<1xf32> to vector<1x1x1xf32>
    %65 = vector.extract %64[0, 0, 0] : f32 from vector<1x1x1xf32>
    %66 = arith.extui %51 : vector<8x1xi1> to vector<8x1xi32>
    %67 = arith.sitofp %66 : vector<8x1xi32> to vector<8x1xf32>
    %68 = vector.shape_cast %67 : vector<8x1xf32> to vector<1x8x1xf32>
    %cst_31 = arith.constant dense<0.000000e+00> : vector<1xf32>
    %69 = vector.multi_reduction <add>, %68, %cst_31 [1, 2] : vector<1x8x1xf32> to vector<1xf32>
    %70 = vector.shape_cast %69 : vector<1xf32> to vector<1x1x1xf32>
    %71 = vector.extract %70[0, 0, 0] : f32 from vector<1x1x1xf32>
    %72 = tpu.iota {dimensions = array<i32: 0>} : vector<8x128xi32>
    %73 = tpu.iota {dimensions = array<i32: 1>} : vector<8x128xi32>
    %c0_i32 = arith.constant 0 : i32
    %74 = vector.broadcast %c0_i32 : i32 to vector<8x128xi32>
    %75 = arith.cmpi eq, %72, %74 : vector<8x128xi32>
    %c0_i32_32 = arith.constant 0 : i32
    %76 = vector.broadcast %c0_i32_32 : i32 to vector<8x128xi32>
    %77 = arith.cmpi eq, %73, %76 : vector<8x128xi32>
    %78 = arith.andi %75, %77 : vector<8x128xi1>
    %c1_i32 = arith.constant 1 : i32
    %79 = vector.broadcast %c1_i32 : i32 to vector<8x128xi32>
    %80 = arith.cmpi eq, %73, %79 : vector<8x128xi32>
    %81 = arith.andi %75, %80 : vector<8x128xi1>
    %c2_i32 = arith.constant 2 : i32
    %82 = vector.broadcast %c2_i32 : i32 to vector<8x128xi32>
    %83 = arith.cmpi eq, %73, %82 : vector<8x128xi32>
    %84 = arith.andi %75, %83 : vector<8x128xi1>
    %cst_33 = arith.constant 0.000000e+00 : f32
    %85 = vector.broadcast %71 : f32 to vector<8x128xf32>
    %86 = vector.broadcast %cst_33 : f32 to vector<8x128xf32>
    %87 = arith.select %84, %85, %86 : vector<8x128xi1>, vector<8x128xf32>
    %88 = vector.broadcast %65 : f32 to vector<8x128xf32>
    %89 = arith.select %81, %88, %87 : vector<8x128xi1>, vector<8x128xf32>
    %90 = vector.broadcast %57 : f32 to vector<8x128xf32>
    %91 = arith.select %78, %90, %89 : vector<8x128xi1>, vector<8x128xf32>
    %92 = vector.shape_cast %91 : vector<8x128xf32> to vector<1x8x128xf32>
    %c0_34 = arith.constant 0 : index
    %c0_35 = arith.constant 0 : index
    %c0_36 = arith.constant 0 : index
    %93 = vector.load %arg10[%c0_34, %c0_35, %c0_36] : memref<1x8x128xf32, #tpu.memory_space<vmem>>, vector<1x8x128xf32>
    tpu.vector_store %arg10[%c0_34, %c0_35, %c0_36], %92 {strides = array<i32>} : memref<1x8x128xf32, #tpu.memory_space<vmem>>, vector<1x8x128xf32>,
    return
  }
  func.func @transform_0(%arg0: i32) -> (i32, i32) {
    %c0_i32 = arith.constant 0 : i32
    %c0_i32_0 = arith.constant 0 : i32
    return %arg0, %c0_i32 : i32, i32
  }
  func.func @transform_1(%arg0: i32) -> (i32, i32) {
    %c0_i32 = arith.constant 0 : i32
    %c0_i32_0 = arith.constant 0 : i32
    %c0_i32_1 = arith.constant 0 : i32
    return %c0_i32, %c0_i32_0 : i32, i32
  }
  func.func @transform_2(%arg0: i32) -> (i32, i32) {
    %c0_i32 = arith.constant 0 : i32
    %c0_i32_0 = arith.constant 0 : i32
    %c0_i32_1 = arith.constant 0 : i32
    return %c0_i32, %c0_i32_0 : i32, i32
  }
  func.func @transform_3(%arg0: i32) -> (i32, i32) {
    %c0_i32 = arith.constant 0 : i32
    %c0_i32_0 = arith.constant 0 : i32
    %c0_i32_1 = arith.constant 0 : i32
    return %c0_i32, %c0_i32_0 : i32, i32
  }
  func.func @transform_4(%arg0: i32) -> (i32, i32) {
    %c0_i32 = arith.constant 0 : i32
    %c0_i32_0 = arith.constant 0 : i32
    %c0_i32_1 = arith.constant 0 : i32
    return %c0_i32, %c0_i32_0 : i32, i32
  }
  func.func @transform_5(%arg0: i32) -> (i32, i32) {
    %c0_i32 = arith.constant 0 : i32
    %c0_i32_0 = arith.constant 0 : i32
    %c0_i32_1 = arith.constant 0 : i32
    return %c0_i32, %c0_i32_0 : i32, i32
  }
  func.func @transform_6(%arg0: i32) -> (i32, i32) {
    %c0_i32 = arith.constant 0 : i32
    %c0_i32_0 = arith.constant 0 : i32
    %c0_i32_1 = arith.constant 0 : i32
    return %c0_i32, %c0_i32_0 : i32, i32
  }
  func.func @transform_7(%arg0: i32) -> (i32, i32) {
    %c0_i32 = arith.constant 0 : i32
    %c0_i32_0 = arith.constant 0 : i32
    return %arg0, %c0_i32 : i32, i32
  }
  func.func @transform_8(%arg0: i32) -> (i32, i32) {
    %c0_i32 = arith.constant 0 : i32
    %c0_i32_0 = arith.constant 0 : i32
    return %arg0, %c0_i32 : i32, i32
  }
  func.func @transform_9(%arg0: i32) -> (i32, i32, i32) {
    %c0_i32 = arith.constant 0 : i32
    %c0_i32_0 = arith.constant 0 : i32
    %c0_i32_1 = arith.constant 0 : i32
    return %arg0, %c0_i32, %c0_i32_0 : i32, i32, i32
  }
}

</mosaic_0001>

<llo_original>
// kernel: tpu_custom_call.1
$region0: #{tpu_custom_call.1}
  #allocation0 [shape = 'u32[]', space=smem, size = 0x4, offset = 0x4, fixed_abs, tag = 'smem constant byte address 0x4 - core index']
  #allocation1 [shape = 'u32[144,128]{1,0:T(1,128)}', space=vmem, size = 0x12000, scoped, tag = 'internal scratch']
  %s0 = inlined_call_operand.vmem [shape: f32[24,32], index: 0, kind: input, shape index: {}]
  %s1 = inlined_call_operand.hbm [shape: f32[16,128], index: 1, kind: input, shape index: {}]
  %s2 = inlined_call_operand.vmem [shape: f32[1,128], index: 2, kind: input, shape index: {}]
  %s3 = inlined_call_operand.hbm [shape: f32[128,128], index: 3, kind: input, shape index: {}]
  %s4 = inlined_call_operand.vmem [shape: f32[1,128], index: 4, kind: input, shape index: {}]
  %s5 = inlined_call_operand.hbm [shape: f32[128,128], index: 5, kind: input, shape index: {}]
  %s6 = inlined_call_operand.vmem [shape: f32[1,128], index: 6, kind: input, shape index: {}]
  %s7 = inlined_call_operand.vmem [shape: s32[24,1], index: 7, kind: input, shape index: {}]
  %s8 = inlined_call_operand.hbm [shape: f32[24,128], index: 8, kind: output, shape index: {0}]
  %s9 = inlined_call_operand.hbm [shape: f32[3,8,128], index: 9, kind: output, shape index: {1}]
  %10 = xla_tuple %s8, %s9
  %s11 = sld [smem:[#allocation0]]
  $region85: #{tpu_custom_call.1} parent=0
    _
  %s13 = ssub.s32 1, %s11
  %s14 = scalar_select 0, %s13, %s11
  $region1: #{tpu_custom_call.1} parent=0
    #allocation2 [shape = 'u8[8192]{0}', space=vmem, size = 0x2000, scoped, tag = 'input window, operand 1, single buffered']
    #allocation3 [shape = 's32[2]{0}', space=sflag, size = 0x8, scoped, tag = 'scoped memory for tpu_custom_call.1']
    #allocation4 [shape = 's32[2]{0}', space=sflag, size = 0x8, scoped, tag = 'scoped memory for tpu_custom_call.1']
    #allocation5 [shape = 'u8[65536]{0}', space=vmem, size = 0x10000, scoped, tag = 'input window, operand 3, single buffered']
    #allocation6 [shape = 's32[1]{0}', space=sflag, size = 0x4, scoped, tag = 'scoped memory for tpu_custom_call.1']
    #allocation7 [shape = 'u8[65536]{0}', space=vmem, size = 0x10000, scoped, tag = 'input window, operand 5, single buffered']
    #allocation8 [shape = 'u8[8192]{0}', space=vmem, size = 0x2000, scoped, tag = 'output window, operand 0']
    #allocation9 [shape = 'u8[8192]{0}', space=vmem, size = 0x2000, scoped, tag = 'output window, operand 1']
    #allocation10 [shape = 's32[2]{0}', space=sflag, size = 0x8, scoped, tag = 'scoped memory for tpu_custom_call.1']
    %15 = vsyncpa [#allocation3], 0
    %16 = vsyncpa [#allocation6], 0
    %17 = vsyncpa [#allocation4], 0
    %s18 = scalar_lea.sflag [#allocation4], 1
    %19 = vsyncpa %s18, 0
    %20 = vsyncpa [#allocation10], 0
    %s21 = scalar_lea.sflag [#allocation10], 1
    %22 = vsyncpa %s21, 0
    loop: start=0, step=1, limit=5
    $region2: #{tpu_custom_call.1} parent=1 // loop_pre_header
      _
    $region3: #{tpu_custom_call.1} parent=1 // loop_header
      %s24 = sphi 0, %s28
      %p25 = scmp.ge.s32.totalorder %s24, 5
      %s34 = sphi 0, %s36
      %s37 = sphi 0, %s34
      %s38 = sphi 0, %s37
      %s54 = sphi 0, %s38
      %s58 = sphi 0, %s58
      %s60 = sphi 0, %s58
      %s61 = sphi 0, %s60
      %s75 = sphi 0, %s61
      %s79 = sphi 0, %s79
      %s81 = sphi 0, %s79
      %s82 = sphi 0, %s81
      %s96 = sphi 0, %s82
      %s100 = sphi 0, %s100
      %s102 = sphi 0, %s100
      %s103 = sphi 0, %s102
      %s117 = sphi 0, %s103
      %s121 = sphi 0, %s121
      %s123 = sphi 0, %s121
      %s124 = sphi 0, %s123
      %s138 = sphi 0, %s124
      %s142 = sphi 0, %s142
      %s144 = sphi 0, %s142
      %s145 = sphi 0, %s144
      %s159 = sphi 0, %s145
      %s163 = sphi 0, %s163
      %s165 = sphi 0, %s163
      %s166 = sphi 0, %s165
      %s180 = sphi 0, %s166
      %s186 = sphi 0, %s188
      %s189 = sphi 0, %s186
      %s190 = sphi 0, %s189
      %s206 = sphi 0, %s190
      %s212 = sphi 0, %s214
      %s215 = sphi 0, %s212
      %s216 = sphi 0, %s215
      %s232 = sphi 0, %s216
      %s238 = sphi 0, %s240
      %s241 = sphi 0, %s238
      %s242 = sphi 0, %s241
      %s258 = sphi 0, %s242
    $region4: #{tpu_custom_call.1} parent=1 // loop_header_branch
      %27 = sbr.rel (%p25) target = $region8
    $region5: #{tpu_custom_call.1} parent=1 // loop_body
      %s29 = ssub.s32 %s24, 1
      %s30 = ssub.s32 %s24, 2
      %s31 = sadd.s32 %s24, 1
      %s32 = ssub.s32 %s24, %s31
      %p33 = scmp.eq.s32.totalorder %s32, 0
      %s35 = sadd.s32 %s34, 1
      %s36 = scalar_select %p33, %s34, %s35
      %p39 = pneg %p33
      %p40 = scmp.eq.s32.totalorder %s24, 2
      %p41 = por %p39, %p40
      %p42 = scmp.ne.s32.totalorder %s34, %s37
      %p43 = scmp.eq.s32.totalorder %s24, 0
      %p44 = por %p42, %p43
      %p45 = scmp.ne.s32.totalorder %s34, %s37
      %p46 = scmp.eq.s32.totalorder %s29, 2
      %p47 = por %p45, %p46
      %p48 = scmp.ne.s32.totalorder %s37, %s38
      %p49 = scmp.eq.s32.totalorder %s29, 0
      %p50 = por %p48, %p49
      %p51 = scmp.ne.s32.totalorder %s37, %s38
      %p52 = scmp.eq.s32.totalorder %s30, 2
      %p53 = por %p51, %p52
      %p55 = scmp.ne.s32.totalorder %s38, %s54
      %p56 = scmp.eq.s32.totalorder %s30, 0
      %p57 = por %p55, %p56
      %s59 = sadd.s32 %s58, 1
      %p62 = scmp.eq.s32.totalorder %s24, 2
      %p63 = scmp.ne.s32.totalorder %s58, %s60
      %p64 = scmp.eq.s32.totalorder %s24, 0
      %p65 = por %p63, %p64
      %p66 = scmp.ne.s32.totalorder %s58, %s60
      %p67 = scmp.eq.s32.totalorder %s29, 2
      %p68 = por %p66, %p67
      %p69 = scmp.ne.s32.totalorder %s60, %s61
      %p70 = scmp.eq.s32.totalorder %s29, 0
      %p71 = por %p69, %p70
      %p72 = scmp.ne.s32.totalorder %s60, %s61
      %p73 = scmp.eq.s32.totalorder %s30, 2
      %p74 = por %p72, %p73
      %p76 = scmp.ne.s32.totalorder %s61, %s75
      %p77 = scmp.eq.s32.totalorder %s30, 0
      %p78 = por %p76, %p77
      %s80 = sadd.s32 %s79, 1
      %p83 = scmp.eq.s32.totalorder %s24, 2
      %p84 = scmp.ne.s32.totalorder %s79, %s81
      %p85 = scmp.eq.s32.totalorder %s24, 0
      %p86 = por %p84, %p85
      %p87 = scmp.ne.s32.totalorder %s79, %s81
      %p88 = scmp.eq.s32.totalorder %s29, 2
      %p89 = por %p87, %p88
      %p90 = scmp.ne.s32.totalorder %s81, %s82
      %p91 = scmp.eq.s32.totalorder %s29, 0
      %p92 = por %p90, %p91
      %p93 = scmp.ne.s32.totalorder %s81, %s82
      %p94 = scmp.eq.s32.totalorder %s30, 2
      %p95 = por %p93, %p94
      %p97 = scmp.ne.s32.totalorder %s82, %s96
      %p98 = scmp.eq.s32.totalorder %s30, 0
      %p99 = por %p97, %p98
      %s101 = sadd.s32 %s100, 1
      %p104 = scmp.eq.s32.totalorder %s24, 2
      %p105 = scmp.ne.s32.totalorder %s100, %s102
      %p106 = scmp.eq.s32.totalorder %s24, 0
      %p107 = por %p105, %p106
      %p108 = scmp.ne.s32.totalorder %s100, %s102
      %p109 = scmp.eq.s32.totalorder %s29, 2
      %p110 = por %p108, %p109
      %p111 = scmp.ne.s32.totalorder %s102, %s103
      %p112 = scmp.eq.s32.totalorder %s29, 0
      %p113 = por %p111, %p112
      %p114 = scmp.ne.s32.totalorder %s102, %s103
      %p115 = scmp.eq.s32.totalorder %s30, 2
      %p116 = por %p114, %p115
      %p118 = scmp.ne.s32.totalorder %s103, %s117
      %p119 = scmp.eq.s32.totalorder %s30, 0
      %p120 = por %p118, %p119
      %s122 = sadd.s32 %s121, 1
      %p125 = scmp.eq.s32.totalorder %s24, 2
      %p126 = scmp.ne.s32.totalorder %s121, %s123
      %p127 = scmp.eq.s32.totalorder %s24, 0
      %p128 = por %p126, %p127
      %p129 = scmp.ne.s32.totalorder %s121, %s123
      %p130 = scmp.eq.s32.totalorder %s29, 2
      %p131 = por %p129, %p130
      %p132 = scmp.ne.s32.totalorder %s123, %s124
      %p133 = scmp.eq.s32.totalorder %s29, 0
      %p134 = por %p132, %p133
      %p135 = scmp.ne.s32.totalorder %s123, %s124
      %p136 = scmp.eq.s32.totalorder %s30, 2
      %p137 = por %p135, %p136
      %p139 = scmp.ne.s32.totalorder %s124, %s138
      %p140 = scmp.eq.s32.totalorder %s30, 0
      %p141 = por %p139, %p140
      %s143 = sadd.s32 %s142, 1
      %p146 = scmp.eq.s32.totalorder %s24, 2
      %p147 = scmp.ne.s32.totalorder %s142, %s144
      %p148 = scmp.eq.s32.totalorder %s24, 0
      %p149 = por %p147, %p148
      %p150 = scmp.ne.s32.totalorder %s142, %s144
      %p151 = scmp.eq.s32.totalorder %s29, 2
      %p152 = por %p150, %p151
      %p153 = scmp.ne.s32.totalorder %s144, %s145
      %p154 = scmp.eq.s32.totalorder %s29, 0
      %p155 = por %p153, %p154
      %p156 = scmp.ne.s32.totalorder %s144, %s145
      %p157 = scmp.eq.s32.totalorder %s30, 2
      %p158 = por %p156, %p157
      %p160 = scmp.ne.s32.totalorder %s145, %s159
      %p161 = scmp.eq.s32.totalorder %s30, 0
      %p162 = por %p160, %p161
      %s164 = sadd.s32 %s163, 1
      %p167 = scmp.eq.s32.totalorder %s24, 2
      %p168 = scmp.ne.s32.totalorder %s163, %s165
      %p169 = scmp.eq.s32.totalorder %s24, 0
      %p170 = por %p168, %p169
      %p171 = scmp.ne.s32.totalorder %s163, %s165
      %p172 = scmp.eq.s32.totalorder %s29, 2
      %p173 = por %p171, %p172
      %p174 = scmp.ne.s32.totalorder %s165, %s166
      %p175 = scmp.eq.s32.totalorder %s29, 0
      %p176 = por %p174, %p175
      %p177 = scmp.ne.s32.totalorder %s165, %s166
      %p178 = scmp.eq.s32.totalorder %s30, 2
      %p179 = por %p177, %p178
      %p181 = scmp.ne.s32.totalorder %s166, %s180
      %p182 = scmp.eq.s32.totalorder %s30, 0
      %p183 = por %p181, %p182
      %s184 = ssub.s32 %s24, %s31
      %p185 = scmp.eq.s32.totalorder %s184, 0
      %s187 = sadd.s32 %s186, 1
      %s188 = scalar_select %p185, %s186, %s187
      %p191 = pneg %p185
      %p192 = scmp.eq.s32.totalorder %s24, 2
      %p193 = por %p191, %p192
      %p194 = scmp.ne.s32.totalorder %s186, %s189
      %p195 = scmp.eq.s32.totalorder %s24, 0
      %p196 = por %p194, %p195
      %p197 = scmp.ne.s32.totalorder %s186, %s189
      %p198 = scmp.eq.s32.totalorder %s29, 2
      %p199 = por %p197, %p198
      %p200 = scmp.ne.s32.totalorder %s189, %s190
      %p201 = scmp.eq.s32.totalorder %s29, 0
      %p202 = por %p200, %p201
      %p203 = scmp.ne.s32.totalorder %s189, %s190
      %p204 = scmp.eq.s32.totalorder %s30, 2
      %p205 = por %p203, %p204
      %p207 = scmp.ne.s32.totalorder %s190, %s206
      %p208 = scmp.eq.s32.totalorder %s30, 0
      %p209 = por %p207, %p208
      %s210 = ssub.s32 %s24, %s31
      %p211 = scmp.eq.s32.totalorder %s210, 0
      %s213 = sadd.s32 %s212, 1
      %s214 = scalar_select %p211, %s212, %s213
      %p217 = pneg %p211
      %p218 = scmp.eq.s32.totalorder %s24, 2
      %p219 = por %p217, %p218
      %p220 = scmp.ne.s32.totalorder %s212, %s215
      %p221 = scmp.eq.s32.totalorder %s24, 0
      %p222 = por %p220, %p221
      %p223 = scmp.ne.s32.totalorder %s212, %s215
      %p224 = scmp.eq.s32.totalorder %s29, 2
      %p225 = por %p223, %p224
      %p226 = scmp.ne.s32.totalorder %s215, %s216
      %p227 = scmp.eq.s32.totalorder %s29, 0
      %p228 = por %p226, %p227
      %p229 = scmp.ne.s32.totalorder %s215, %s216
      %p230 = scmp.eq.s32.totalorder %s30, 2
      %p231 = por %p229, %p230
      %p233 = scmp.ne.s32.totalorder %s216, %s232
      %p234 = scmp.eq.s32.totalorder %s30, 0
      %p235 = por %p233, %p234
      %s236 = ssub.s32 %s24, %s31
      %p237 = scmp.eq.s32.totalorder %s236, 0
      %s239 = sadd.s32 %s238, 1
      %s240 = scalar_select %p237, %s238, %s239
      %p243 = pneg %p237
      %p244 = scmp.eq.s32.totalorder %s24, 2
      %p245 = por %p243, %p244
      %p246 = scmp.ne.s32.totalorder %s238, %s241
      %p247 = scmp.eq.s32.totalorder %s24, 0
      %p248 = por %p246, %p247
      %p249 = scmp.ne.s32.totalorder %s238, %s241
      %p250 = scmp.eq.s32.totalorder %s29, 2
      %p251 = por %p249, %p250
      %p252 = scmp.ne.s32.totalorder %s241, %s242
      %p253 = scmp.eq.s32.totalorder %s29, 0
      %p254 = por %p252, %p253
      %p255 = scmp.ne.s32.totalorder %s241, %s242
      %p256 = scmp.eq.s32.totalorder %s30, 2
      %p257 = por %p255, %p256
      %p259 = scmp.ne.s32.totalorder %s242, %s258
      %p260 = scmp.eq.s32.totalorder %s30, 0
      %p261 = por %p259, %p260
      %p262 = scmp.le.s32.totalorder 1, %s24
      %p263 = scmp.lt.s32.totalorder %s24, 4
      %p264 = pnand %p262, %p263
      %p265 = pneg %p264
      // Predicated region
      $region9: #{tpu_custom_call.1} parent=5 // pred_check
        _
      $region10: #{tpu_custom_call.1} parent=5 // pred_check_branch
        %267 = sbr.rel (%p264) target = $region12
      $region11: #{tpu_custom_call.1} parent=5 // pred_region
        %s268 = ssub.s32 %s24, 1
        // Predicated region
        $region13: #{tpu_custom_call.1} parent=11 // pred_check
          %p269 = pneg %p71
        $region14: #{tpu_custom_call.1} parent=11 // pred_check_branch
          %271 = sbr.rel (%p269) target = $region16
        $region15: #{tpu_custom_call.1} parent=11 // pred_region
          %s273 = ssub.s32 256, 256
          %274 = vsyncadd [#allocation3], %s273
          %s275 = sshll.u32 [#allocation2], 4
          %s276 = int_to_ptr.vmem [resolvable:$true] %s275
          %281 = dma.hbm_to_vmem [thread:$0]  %s1, 256, %s276, [#allocation3], 128, 128, 8
        $region16: #{tpu_custom_call.1} parent=11 // pred_fallthru
          _
        // Predicated region
        $region17: #{tpu_custom_call.1} parent=11 // pred_check
          %p282 = pneg %p92
        $region18: #{tpu_custom_call.1} parent=11 // pred_check_branch
          %284 = sbr.rel (%p282) target = $region20
        $region19: #{tpu_custom_call.1} parent=11 // pred_region
          _
        $region20: #{tpu_custom_call.1} parent=11 // pred_fallthru
          _
        // Predicated region
        $region21: #{tpu_custom_call.1} parent=11 // pred_check
          %p285 = pneg %p113
        $region22: #{tpu_custom_call.1} parent=11 // pred_check_branch
          %287 = sbr.rel (%p285) target = $region24
        $region23: #{tpu_custom_call.1} parent=11 // pred_region
          %s289 = ssub.s32 2048, 2048
          %290 = vsyncadd [#allocation6], %s289
          %s291 = sshll.u32 [#allocation5], 4
          %s292 = int_to_ptr.vmem [resolvable:$true] %s291
          %297 = dma.hbm_to_vmem [thread:$0]  %s3, 2048, %s292, [#allocation6], 128, 128, 8
        $region24: #{tpu_custom_call.1} parent=11 // pred_fallthru
          _
        // Predicated region
        $region25: #{tpu_custom_call.1} parent=11 // pred_check
          %p298 = pneg %p134
        $region26: #{tpu_custom_call.1} parent=11 // pred_check_branch
          %300 = sbr.rel (%p298) target = $region28
        $region27: #{tpu_custom_call.1} parent=11 // pred_region
          _
        $region28: #{tpu_custom_call.1} parent=11 // pred_fallthru
          _
        // Predicated region
        $region29: #{tpu_custom_call.1} parent=11 // pred_check
          %p301 = pneg %p155
        $region30: #{tpu_custom_call.1} parent=11 // pred_check_branch
          %303 = sbr.rel (%p301) target = $region32
        $region31: #{tpu_custom_call.1} parent=11 // pred_region
          %s305 = ssub.s32 2048, 2048
          %306 = vsyncadd [#allocation6], %s305
          %s307 = sshll.u32 [#allocation7], 4
          %s308 = int_to_ptr.vmem [resolvable:$true] %s307
          %313 = dma.hbm_to_vmem [thread:$0]  %s5, 2048, %s308, [#allocation6], 128, 128, 8
        $region32: #{tpu_custom_call.1} parent=11 // pred_fallthru
          _
        // Predicated region
        $region33: #{tpu_custom_call.1} parent=11 // pred_check
          %p314 = pneg %p176
        $region34: #{tpu_custom_call.1} parent=11 // pred_check_branch
          %316 = sbr.rel (%p314) target = $region36
        $region35: #{tpu_custom_call.1} parent=11 // pred_region
          _
        $region36: #{tpu_custom_call.1} parent=11 // pred_fallthru
          _
      $region12: #{tpu_custom_call.1} parent=5 // pred_fallthru
        _
      %p317 = scmp.lt.s32.totalorder %s24, 3
      // Predicated region
      $region37: #{tpu_custom_call.1} parent=5 // pred_check
        %p318 = pneg %p317
      $region38: #{tpu_custom_call.1} parent=5 // pred_check_branch
        %320 = sbr.rel (%p318) target = $region40
      $region39: #{tpu_custom_call.1} parent=5 // pred_region
        // Predicated region
        $region41: #{tpu_custom_call.1} parent=39 // pred_check
          %p321 = pneg %p44
        $region42: #{tpu_custom_call.1} parent=39 // pred_check_branch
          %323 = sbr.rel (%p321) target = $region44
        $region43: #{tpu_custom_call.1} parent=39 // pred_region
          %p324 = scmp.lt.s32.totalorder %s24, 2
          %s325 = scalar_select %p324, %s24, 2
          %s326 = smul.addr %s325, 8
          %s327 = scalar_lea.vmem %s0, %s326
        $region44: #{tpu_custom_call.1} parent=39 // pred_fallthru
          _
        // Predicated region
        $region45: #{tpu_custom_call.1} parent=39 // pred_check
          %p328 = pneg %p196
        $region46: #{tpu_custom_call.1} parent=39 // pred_check_branch
          %330 = sbr.rel (%p328) target = $region48
        $region47: #{tpu_custom_call.1} parent=39 // pred_region
          %p331 = scmp.lt.s32.totalorder %s24, 2
          %s332 = scalar_select %p331, %s24, 2
          %s333 = smul.addr %s332, 8
          %s334 = scalar_lea.vmem %s7, %s333
        $region48: #{tpu_custom_call.1} parent=39 // pred_fallthru
          _
      $region40: #{tpu_custom_call.1} parent=5 // pred_fallthru
        _
      %p335 = scmp.le.s32.totalorder 1, %s24
      %p336 = scmp.lt.s32.totalorder %s24, 4
      %p337 = pnand %p335, %p336
      %p338 = pneg %p337
      // Predicated region
      $region49: #{tpu_custom_call.1} parent=5 // pred_check
        _
      $region50: #{tpu_custom_call.1} parent=5 // pred_check_branch
        %340 = sbr.rel (%p337) target = $region52
      $region51: #{tpu_custom_call.1} parent=5 // pred_region
        %s341 = ssub.s32 %s24, 1
        // Predicated region
        $region53: #{tpu_custom_call.1} parent=51 // pred_check
          %p342 = pneg %p71
        $region54: #{tpu_custom_call.1} parent=51 // pred_check_branch
          %344 = sbr.rel (%p342) target = $region56
        $region55: #{tpu_custom_call.1} parent=51 // pred_region
          %345 = dma.done [#allocation3], 256
        $region56: #{tpu_custom_call.1} parent=51 // pred_fallthru
          _
        // Predicated region
        $region57: #{tpu_custom_call.1} parent=51 // pred_check
          %p346 = pneg %p113
        $region58: #{tpu_custom_call.1} parent=51 // pred_check_branch
          %348 = sbr.rel (%p346) target = $region60
        $region59: #{tpu_custom_call.1} parent=51 // pred_region
          %349 = dma.done [#allocation6], 2048
        $region60: #{tpu_custom_call.1} parent=51 // pred_fallthru
          _
        // Predicated region
        $region61: #{tpu_custom_call.1} parent=51 // pred_check
          %p350 = pneg %p155
        $region62: #{tpu_custom_call.1} parent=51 // pred_check_branch
          %352 = sbr.rel (%p350) target = $region64
        $region63: #{tpu_custom_call.1} parent=51 // pred_region
          %353 = dma.done [#allocation6], 2048
        $region64: #{tpu_custom_call.1} parent=51 // pred_fallthru
          _
        %p354 = scmp.lt.s32.totalorder %s29, 2
        %s355 = scalar_select %p354, %s29, 2
        %s356 = smul.addr %s355, 8
        %s357 = scalar_lea.vmem %s0, %s356
        %p358 = pneg %p50
        %p359 = pneg %p47
        %p360 = pneg %p71
        %p361 = pneg %p68
        %p362 = pneg %p92
        %p363 = pneg %p89
        %p364 = pneg %p113
        %p365 = pneg %p110
        %p366 = pneg %p134
        %p367 = pneg %p131
        %p368 = pneg %p155
        %p369 = pneg %p152
        %p370 = pneg %p176
        %p371 = pneg %p173
        %p372 = scmp.lt.s32.totalorder %s29, 2
        %s373 = scalar_select %p372, %s29, 2
        %s374 = smul.addr %s373, 8
        %s375 = scalar_lea.vmem %s7, %s374
        %p376 = pneg %p202
        %p377 = pneg %p199
        %p378 = pneg %p228
        %p379 = pneg %p225
        %s380 = sand.u32 %s215, 1
        %s381 = scalar_lea.sflag [#allocation4], %s380
        %s382 = sand.u32 %s215, 1
        %s383 = smul.addr %s382, 8
        %s384 = scalar_lea.vmem [#allocation8], %s383
        %p385 = pneg %p254
        %p386 = pneg %p251
        %s387 = sand.u32 %s241, 1
        %s388 = scalar_lea.sflag [#allocation10], %s387
        %s389 = sand.u32 %s241, 1
        %s390 = smul.addr %s389, 8
        %s391 = scalar_lea.vmem [#allocation9], %s390
        %p392 = scmp.lt.s32.totalorder %s29, 2
        %s393 = scalar_select %p392, %s29, 2
        %s394 = smul.addr %s393, 8
        %s395 = scalar_lea.vmem %s0, %s394
        %p396 = scmp.lt.s32.totalorder %s29, 2
        %s397 = scalar_select %p396, %s29, 2
        %s398 = smul.addr %s397, 8
        %s399 = scalar_lea.vmem %s7, %s398
        %v400 = vld [vmem:[%s395] sm:$0xff]
        %v401 = vld [vmem:[#allocation2] sm:$0xff]
        %v402 = vld [vmem:[#allocation2 + $0x8] sm:$0xff]
        %v403 = vld [vmem:[%s2] sm:$0x1]
        %v405 = vlaneseq
        %v406 = vshrl.u32 %v405, 7
        %v407 = vsub.s32 0, %v406
        %v408 = vrot.slane %v403, %v407
        %vm410 = vcmask 130048
        %v412 = vsel %vm410, %v400, 0
        %414 = vmatprep.subr.mxu0 0.0
        %415 = vmatpush1.msra.mxu0 0.0
        %416 = vmatprep.subr.mxu0 0.0
        %417 = vmatpush1.msra.mxu0 0.0
        %418 = vmatprep.subr.mxu0 0.0
        %419 = vmatpush1.msra.mxu0 0.0
        %420 = vmatprep.subr.mxu0 0.0
        %421 = vmatpush1.msra.mxu0 0.0
        %422 = vmatprep.subr.mxu0 0.0
        %423 = vmatpush1.msra.mxu0 0.0
        %424 = vmatprep.subr.mxu0 0.0
        %425 = vmatpush1.msra.mxu0 0.0
        %426 = vmatprep.subr.mxu0 0.0
        %427 = vmatpush1.msra.mxu0 0.0
        %428 = vmatprep.subr.mxu0 0.0
        %429 = vmatpush1.msra.mxu0 0.0
        %430 = vmatprep.subr.mxu0 0.0
        %431 = vmatpush1.msra.mxu0 0.0
        %432 = vmatprep.subr.mxu0 0.0
        %433 = vmatpush1.msra.mxu0 0.0
        %434 = vmatprep.subr.mxu0 0.0
        %435 = vmatpush1.msra.mxu0 0.0
        %436 = vmatprep.subr.mxu0 0.0
        %437 = vmatpush1.msra.mxu0 0.0
        %438 = vmatprep.subr.mxu0 0.0
        %439 = vmatpush1.msra.mxu0 0.0
        %440 = vmatprep.subr.mxu0 0.0
        %441 = vmatpush1.msra.mxu0 0.0
        %442 = vmatprep.subr.mxu0 0.0
        %443 = vmatpush1.msra.mxu0 %v402
        %444 = vmatprep.subr.mxu0 0.0
        %445 = vmatpush1.msra.mxu0 %v401
        %446 = vmatprep.subr.mxu0 0.0
        %447 = vmatpush2.msra.mxu0 0.0
        %448 = vmatprep.subr.mxu0 0.0
        %449 = vmatpush2.msra.mxu0 0.0
        %450 = vmatprep.subr.mxu0 0.0
        %451 = vmatpush2.msra.mxu0 0.0
        %452 = vmatprep.subr.mxu0 0.0
        %453 = vmatpush2.msra.mxu0 0.0
        %454 = vmatprep.subr.mxu0 0.0
        %455 = vmatpush2.msra.mxu0 0.0
        %456 = vmatprep.subr.mxu0 0.0
        %457 = vmatpush2.msra.mxu0 0.0
        %458 = vmatprep.subr.mxu0 0.0
        %459 = vmatpush2.msra.mxu0 0.0
        %460 = vmatprep.subr.mxu0 0.0
        %461 = vmatpush2.msra.mxu0 0.0
        %462 = vmatprep.subr.mxu0 0.0
        %463 = vmatpush2.msra.mxu0 0.0
        %464 = vmatprep.subr.mxu0 0.0
        %465 = vmatpush2.msra.mxu0 0.0
        %466 = vmatprep.subr.mxu0 0.0
        %467 = vmatpush2.msra.mxu0 0.0
        %468 = vmatprep.subr.mxu0 0.0
        %469 = vmatpush2.msra.mxu0 0.0
        %470 = vmatprep.subr.mxu0 0.0
        %471 = vmatpush2.msra.mxu0 0.0
        %472 = vmatprep.subr.mxu0 0.0
        %473 = vmatpush2.msra.mxu0 0.0
        %474 = vmatprep.subr.mxu0 0.0
        %475 = vmatpush2.msra.mxu0 0.0
        %476 = vmatprep.subr.mxu0 0.0
        %477 = vmatpush2.msra.mxu0 0.0
        %478 = vmatprep.mubr.f32.mxu0 0.0
        %479 = vmatmul.mubr.f32.gmra.mxu0 %v412
        %v480 = vpop.f32.mrf.mxu0
        %v481 = vadd.f32 %v408, %v480
        %v482 = vpop.f32.mrf.mxu0
        %483 = vdwg.mxu0
        %v484 = vmax.f32 %v481, 0.0
        %v485 = vld [vmem:[#allocation5] sm:$0xff]
        %v486 = vld [vmem:[#allocation5 + $0x8] sm:$0xff]
        %v487 = vld [vmem:[#allocation5 + $0x10] sm:$0xff]
        %v488 = vld [vmem:[#allocation5 + $0x18] sm:$0xff]
        %v489 = vld [vmem:[#allocation5 + $0x20] sm:$0xff]
        %v490 = vld [vmem:[#allocation5 + $0x28] sm:$0xff]
        %v491 = vld [vmem:[#allocation5 + $0x30] sm:$0xff]
        %v492 = vld [vmem:[#allocation5 + $0x38] sm:$0xff]
        %v493 = vld [vmem:[#allocation5 + $0x40] sm:$0xff]
        %v494 = vld [vmem:[#allocation5 + $0x48] sm:$0xff]
        %v495 = vld [vmem:[#allocation5 + $0x50] sm:$0xff]
        %v496 = vld [vmem:[#allocation5 + $0x58] sm:$0xff]
        %v497 = vld [vmem:[#allocation5 + $0x60] sm:$0xff]
        %v498 = vld [vmem:[#allocation5 + $0x68] sm:$0xff]
        %v499 = vld [vmem:[#allocation5 + $0x70] sm:$0xff]
        %v500 = vld [vmem:[#allocation5 + $0x78] sm:$0xff]
        %v501 = vld [vmem:[%s4] sm:$0x1]
        %v503 = vlaneseq
        %v504 = vshrl.u32 %v503, 7
        %v505 = vsub.s32 0, %v504
        %v506 = vrot.slane %v501, %v505
        %508 = vmatprep.subr.mxu0 0.0
        %509 = vmatpush1.msra.mxu0 %v500
        %510 = vmatprep.subr.mxu0 0.0
        %511 = vmatpush1.msra.mxu0 %v499
        %512 = vmatprep.subr.mxu0 0.0
        %513 = vmatpush1.msra.mxu0 %v498
        %514 = vmatprep.subr.mxu0 0.0
        %515 = vmatpush1.msra.mxu0 %v497
        %516 = vmatprep.subr.mxu0 0.0
        %517 = vmatpush1.msra.mxu0 %v496
        %518 = vmatprep.subr.mxu0 0.0
        %519 = vmatpush1.msra.mxu0 %v495
        %520 = vmatprep.subr.mxu0 0.0
        %521 = vmatpush1.msra.mxu0 %v494
        %522 = vmatprep.subr.mxu0 0.0
        %523 = vmatpush1.msra.mxu0 %v493
        %524 = vmatprep.subr.mxu0 0.0
        %525 = vmatpush1.msra.mxu0 %v492
        %526 = vmatprep.subr.mxu0 0.0
        %527 = vmatpush1.msra.mxu0 %v491
        %528 = vmatprep.subr.mxu0 0.0
        %529 = vmatpush1.msra.mxu0 %v490
        %530 = vmatprep.subr.mxu0 0.0
        %531 = vmatpush1.msra.mxu0 %v489
        %532 = vmatprep.subr.mxu0 0.0
        %533 = vmatpush1.msra.mxu0 %v488
        %534 = vmatprep.subr.mxu0 0.0
        %535 = vmatpush1.msra.mxu0 %v487
        %536 = vmatprep.subr.mxu0 0.0
        %537 = vmatpush1.msra.mxu0 %v486
        %538 = vmatprep.subr.mxu0 0.0
        %539 = vmatpush1.msra.mxu0 %v485
        %540 = vmatprep.subr.mxu0 0.0
        %541 = vmatpush2.msra.mxu0 0.0
        %542 = vmatprep.subr.mxu0 0.0
        %543 = vmatpush2.msra.mxu0 0.0
        %544 = vmatprep.subr.mxu0 0.0
        %545 = vmatpush2.msra.mxu0 0.0
        %546 = vmatprep.subr.mxu0 0.0
        %547 = vmatpush2.msra.mxu0 0.0
        %548 = vmatprep.subr.mxu0 0.0
        %549 = vmatpush2.msra.mxu0 0.0
        %550 = vmatprep.subr.mxu0 0.0
        %551 = vmatpush2.msra.mxu0 0.0
        %552 = vmatprep.subr.mxu0 0.0
        %553 = vmatpush2.msra.mxu0 0.0
        %554 = vmatprep.subr.mxu0 0.0
        %555 = vmatpush2.msra.mxu0 0.0
        %556 = vmatprep.subr.mxu0 0.0
        %557 = vmatpush2.msra.mxu0 0.0
        %558 = vmatprep.subr.mxu0 0.0
        %559 = vmatpush2.msra.mxu0 0.0
        %560 = vmatprep.subr.mxu0 0.0
        %561 = vmatpush2.msra.mxu0 0.0
        %562 = vmatprep.subr.mxu0 0.0
        %563 = vmatpush2.msra.mxu0 0.0
        %564 = vmatprep.subr.mxu0 0.0
        %565 = vmatpush2.msra.mxu0 0.0
        %566 = vmatprep.subr.mxu0 0.0
        %567 = vmatpush2.msra.mxu0 0.0
        %568 = vmatprep.subr.mxu0 0.0
        %569 = vmatpush2.msra.mxu0 0.0
        %570 = vmatprep.subr.mxu0 0.0
        %571 = vmatpush2.msra.mxu0 0.0
        %572 = vmatprep.mubr.f32.mxu0 0.0
        %573 = vmatmul.mubr.f32.gmra.mxu0 %v484
        %v574 = vpop.f32.mrf.mxu0
        %v575 = vadd.f32 %v506, %v574
        %v576 = vpop.f32.mrf.mxu0
        %577 = vdwg.mxu0
        %v578 = vmax.f32 %v575, 0.0
        %v579 = vld [vmem:[#allocation7] sm:$0xff]
        %v580 = vld [vmem:[#allocation7 + $0x8] sm:$0xff]
        %v581 = vld [vmem:[#allocation7 + $0x10] sm:$0xff]
        %v582 = vld [vmem:[#allocation7 + $0x18] sm:$0xff]
        %v583 = vld [vmem:[#allocation7 + $0x20] sm:$0xff]
        %v584 = vld [vmem:[#allocation7 + $0x28] sm:$0xff]
        %v585 = vld [vmem:[#allocation7 + $0x30] sm:$0xff]
        %v586 = vld [vmem:[#allocation7 + $0x38] sm:$0xff]
        %v587 = vld [vmem:[#allocation7 + $0x40] sm:$0xff]
        %v588 = vld [vmem:[#allocation7 + $0x48] sm:$0xff]
        %v589 = vld [vmem:[#allocation7 + $0x50] sm:$0xff]
        %v590 = vld [vmem:[#allocation7 + $0x58] sm:$0xff]
        %v591 = vld [vmem:[#allocation7 + $0x60] sm:$0xff]
        %v592 = vld [vmem:[#allocation7 + $0x68] sm:$0xff]
        %v593 = vld [vmem:[#allocation7 + $0x70] sm:$0xff]
        %v594 = vld [vmem:[#allocation7 + $0x78] sm:$0xff]
        %v595 = vld [vmem:[%s6] sm:$0x1]
        %v597 = vlaneseq
        %v598 = vshrl.u32 %v597, 7
        %v599 = vsub.s32 0, %v598
        %v600 = vrot.slane %v595, %v599
        %602 = vmatprep.subr.mxu0 0.0
        %603 = vmatpush1.msra.mxu0 %v594
        %604 = vmatprep.subr.mxu0 0.0
        %605 = vmatpush1.msra.mxu0 %v593
        %606 = vmatprep.subr.mxu0 0.0
        %607 = vmatpush1.msra.mxu0 %v592
        %608 = vmatprep.subr.mxu0 0.0
        %609 = vmatpush1.msra.mxu0 %v591
        %610 = vmatprep.subr.mxu0 0.0
        %611 = vmatpush1.msra.mxu0 %v590
        %612 = vmatprep.subr.mxu0 0.0
        %613 = vmatpush1.msra.mxu0 %v589
        %614 = vmatprep.subr.mxu0 0.0
        %615 = vmatpush1.msra.mxu0 %v588
        %616 = vmatprep.subr.mxu0 0.0
        %617 = vmatpush1.msra.mxu0 %v587
        %618 = vmatprep.subr.mxu0 0.0
        %619 = vmatpush1.msra.mxu0 %v586
        %620 = vmatprep.subr.mxu0 0.0
        %621 = vmatpush1.msra.mxu0 %v585
        %622 = vmatprep.subr.mxu0 0.0
        %623 = vmatpush1.msra.mxu0 %v584
        %624 = vmatprep.subr.mxu0 0.0
        %625 = vmatpush1.msra.mxu0 %v583
        %626 = vmatprep.subr.mxu0 0.0
        %627 = vmatpush1.msra.mxu0 %v582
        %628 = vmatprep.subr.mxu0 0.0
        %629 = vmatpush1.msra.mxu0 %v581
        %630 = vmatprep.subr.mxu0 0.0
        %631 = vmatpush1.msra.mxu0 %v580
        %632 = vmatprep.subr.mxu0 0.0
        %633 = vmatpush1.msra.mxu0 %v579
        %634 = vmatprep.subr.mxu0 0.0
        %635 = vmatpush2.msra.mxu0 0.0
        %636 = vmatprep.subr.mxu0 0.0
        %637 = vmatpush2.msra.mxu0 0.0
        %638 = vmatprep.subr.mxu0 0.0
        %639 = vmatpush2.msra.mxu0 0.0
        %640 = vmatprep.subr.mxu0 0.0
        %641 = vmatpush2.msra.mxu0 0.0
        %642 = vmatprep.subr.mxu0 0.0
        %643 = vmatpush2.msra.mxu0 0.0
        %644 = vmatprep.subr.mxu0 0.0
        %645 = vmatpush2.msra.mxu0 0.0
        %646 = vmatprep.subr.mxu0 0.0
        %647 = vmatpush2.msra.mxu0 0.0
        %648 = vmatprep.subr.mxu0 0.0
        %649 = vmatpush2.msra.mxu0 0.0
        %650 = vmatprep.subr.mxu0 0.0
        %651 = vmatpush2.msra.mxu0 0.0
        %652 = vmatprep.subr.mxu0 0.0
        %653 = vmatpush2.msra.mxu0 0.0
        %654 = vmatprep.subr.mxu0 0.0
        %655 = vmatpush2.msra.mxu0 0.0
        %656 = vmatprep.subr.mxu0 0.0
        %657 = vmatpush2.msra.mxu0 0.0
        %658 = vmatprep.subr.mxu0 0.0
        %659 = vmatpush2.msra.mxu0 0.0
        %660 = vmatprep.subr.mxu0 0.0
        %661 = vmatpush2.msra.mxu0 0.0
        %662 = vmatprep.subr.mxu0 0.0
        %663 = vmatpush2.msra.mxu0 0.0
        %664 = vmatprep.subr.mxu0 0.0
        %665 = vmatpush2.msra.mxu0 0.0
        %666 = vmatprep.mubr.f32.mxu0 0.0
        %667 = vmatmul.mubr.f32.gmra.mxu0 %v578
        %v668 = vpop.f32.mrf.mxu0
        %v669 = vadd.f32 %v600, %v668
        %v670 = vpop.f32.mrf.mxu0
        %671 = vdwg.mxu0
        %672 = vst [vmem:[%s384] sm:$0xff] %v669
        %v673 = vld [vmem:[%s399] sm:$0xff]
        %v674 = vlaneseq
        %v675 = vand.u32 %v674, 127
        %676 = vset.pattern.permute.xlu0 0
        %677 = vperm.xlu0 %676, %v673
        %v678 = vpop.permute.xlu0 %677
        %vm679 = vcmp.eq.s32.totalorder %v675, %v678
        %680 = vmax.xlane.f32.xlu0 %v669
        %v681 = vpop.xlane.xlu0 %680
        %v682 = vsub.f32 %v669, %v681
        %v683 = vmul.f32 %v682, 1.442695
        %v684 = vpow.pop %v683
        %685 = vadd.xlane.f32.xlu0 %v684
        %v686 = vpop.xlane.xlu0 %685
        %v687 = vlog2.pop %v686
        %v688 = vmul.f32 %v687, 0.6931472
        %v689 = vadd.f32 %v681, %v688
        %v690 = vsel %vm679, %v669, 0.0
        %691 = vadd.xlane.f32.xlu0 %v690
        %v692 = vpop.xlane.xlu0 %691
        %v693 = vsub.f32 %v689, %v692
        %vm694 = vcmp.eq.f32.partialorder %v669, %v681
        %v695 = vsel %vm694, %v675, 128
        %v696 = vand.u32 %v695, 65535
        %v697 = vshra.s32 %v695, 16
        %v698 = vcvt.s32.f32 %v696
        %v699 = vcvt.s32.f32 %v697
        %700 = vmin.xlane.f32.xlu0 %v699
        %v701 = vpop.xlane.xlu0 %700
        %vm702 = vcmp.eq.f32.partialorder %v699, %v701
        %v703 = vsel %vm702, %v698, inf
        %704 = vmin.xlane.f32.xlu0 %v703
        %v705 = vpop.xlane.xlu0 %704
        %v706 = vcvt.f32.s32 %v705
        %v707 = vcvt.f32.s32 %v701
        %v708 = vshll.u32 %v707, 16
        %v709 = vadd.s32 %v708, %v706
        %vm710 = vcmp.eq.s32.totalorder %v709, %v673
        %v711 = vlaneseq
        %v712 = vshrl.u32 %v711, 7
        %s713 = smul.u32 %s29, 8
        %v714 = vstv %s713
        %v715 = vadd.s32 %v714, %v712
        %vm716 = vcmp.lt.s32.totalorder %v715, 24
        %v717 = vsel %vm716, %v693, 0.0
        %vm718 = vcmask 7168
        %v719 = vsel %vm718, %v717, 0.0
        %720 = vadd.xlane.f32.xlu0 %v719
        %v721 = vpop.xlane.xlu0 %720
        %v722 = vrot.slane %v721, 4
        %v723 = vadd.f32 %v721, %v722
        %v724 = vrot.slane %v723, 2
        %v725 = vadd.f32 %v723, %v724
        %v726 = vrot.slane %v725, 1
        %v727 = vadd.f32 %v725, %v726
        %s728 = vtos %v727
        %vm729 = vmand %vm716, %vm710
        %v730 = vsel %vm729, 1.0, 0.0
        %v731 = vsel %vm718, %v730, 0.0
        %732 = vadd.xlane.f32.xlu0 %v731
        %v733 = vpop.xlane.xlu0 %732
        %v734 = vrot.slane %v733, 4
        %v735 = vadd.f32 %v733, %v734
        %v736 = vrot.slane %v735, 2
        %v737 = vadd.f32 %v735, %v736
        %v738 = vrot.slane %v737, 1
        %v739 = vadd.f32 %v737, %v738
        %s740 = vtos %v739
        %v741 = vsel %vm716, 1, 0
        %v742 = vcvt.s32.f32 %v741
        %v743 = vsel %vm718, %v742, 0.0
        %744 = vadd.xlane.f32.xlu0 %v743
        %v745 = vpop.xlane.xlu0 %744
        %v746 = vrot.slane %v745, 4
        %v747 = vadd.f32 %v745, %v746
        %v748 = vrot.slane %v747, 2
        %v749 = vadd.f32 %v747, %v748
        %v750 = vrot.slane %v749, 1
        %v751 = vadd.f32 %v749, %v750
        %s752 = vtos %v751
        %vm753 = vcmp.eq.s32.totalorder %v712, 0
        %vm754 = vcmp.eq.s32.totalorder %v675, 0
        %vm755 = vmand %vm753, %vm754
        %vm756 = vcmp.eq.s32.totalorder %v675, 1
        %vm757 = vmand %vm753, %vm756
        %vm758 = vcmp.eq.s32.totalorder %v675, 2
        %vm759 = vmand %vm753, %vm758
        %v760 = vstv %s752
        %v761 = vsel %vm759, %v760, 0.0
        %v762 = vstv %s740
        %v763 = vsel %vm757, %v762, %v761
        %v764 = vstv %s728
        %v765 = vsel %vm755, %v764, %v763
        %766 = vst [vmem:[%s391] sm:$0xff] %v765
        %s767 = sand.u32 %s215, 1
        %s768 = scalar_lea.sflag [#allocation4], %s767
        %s769 = sand.u32 %s215, 1
        %s770 = smul.addr %s769, 8
        %s771 = scalar_lea.vmem [#allocation8], %s770
        %s772 = sand.u32 %s241, 1
        %s773 = scalar_lea.sflag [#allocation10], %s772
        %s774 = sand.u32 %s241, 1
        %s775 = smul.addr %s774, 8
        %s776 = scalar_lea.vmem [#allocation9], %s775
        // Predicated region
        $region65: #{tpu_custom_call.1} parent=51 // pred_check
          %p777 = pneg %p225
        $region66: #{tpu_custom_call.1} parent=51 // pred_check_branch
          %779 = sbr.rel (%p777) target = $region68
        $region67: #{tpu_custom_call.1} parent=51 // pred_region
          %s781 = ssub.s32 128, 128
          %782 = vsyncadd %s768, %s781
          %s783 = smul.addr %s29, 128
          %s784 = scalar_lea.hbm %s8, %s783
          %s786 = sshll.u32 %s771, 4
          %s787 = int_to_ptr.vmem [resolvable:$true] %s786
          %789 = dma.vmem_to_hbm [thread:$0]  %s787, 128, %s784, %s768
        $region68: #{tpu_custom_call.1} parent=51 // pred_fallthru
          _
        // Predicated region
        $region69: #{tpu_custom_call.1} parent=51 // pred_check
          %p790 = pneg %p251
        $region70: #{tpu_custom_call.1} parent=51 // pred_check_branch
          %792 = sbr.rel (%p790) target = $region72
        $region71: #{tpu_custom_call.1} parent=51 // pred_region
          %s794 = ssub.s32 128, 128
          %795 = vsyncadd %s773, %s794
          %s796 = smul.addr %s29, 128
          %s797 = scalar_lea.hbm %s9, %s796
          %s799 = sshll.u32 %s776, 4
          %s800 = int_to_ptr.vmem [resolvable:$true] %s799
          %802 = dma.vmem_to_hbm [thread:$0]  %s800, 128, %s797, %s773
        $region72: #{tpu_custom_call.1} parent=51 // pred_fallthru
          _
      $region52: #{tpu_custom_call.1} parent=5 // pred_fallthru
        _
      %p803 = scmp.le.s32.totalorder 2, %s24
      // Predicated region
      $region73: #{tpu_custom_call.1} parent=5 // pred_check
        %p804 = pneg %p803
      $region74: #{tpu_custom_call.1} parent=5 // pred_check_branch
        %806 = sbr.rel (%p804) target = $region76
      $region75: #{tpu_custom_call.1} parent=5 // pred_region
        %s807 = ssub.s32 %s24, 2
        // Predicated region
        $region77: #{tpu_custom_call.1} parent=75 // pred_check
          %p808 = pneg %p231
        $region78: #{tpu_custom_call.1} parent=75 // pred_check_branch
          %810 = sbr.rel (%p808) target = $region80
        $region79: #{tpu_custom_call.1} parent=75 // pred_region
          %s811 = sand.u32 %s216, 1
          %s812 = scalar_lea.sflag [#allocation4], %s811
          %s813 = sand.u32 %s216, 1
          %s814 = smul.addr %s813, 8
          %s815 = scalar_lea.vmem [#allocation8], %s814
          %816 = dma.done %s812, 128
        $region80: #{tpu_custom_call.1} parent=75 // pred_fallthru
          _
        // Predicated region
        $region81: #{tpu_custom_call.1} parent=75 // pred_check
          %p817 = pneg %p257
        $region82: #{tpu_custom_call.1} parent=75 // pred_check_branch
          %819 = sbr.rel (%p817) target = $region84
        $region83: #{tpu_custom_call.1} parent=75 // pred_region
          %s820 = sand.u32 %s242, 1
          %s821 = scalar_lea.sflag [#allocation10], %s820
          %s822 = sand.u32 %s242, 1
          %s823 = smul.addr %s822, 8
          %s824 = scalar_lea.vmem [#allocation9], %s823
          %825 = dma.done %s821, 128
        $region84: #{tpu_custom_call.1} parent=75 // pred_fallthru
          _
      $region76: #{tpu_custom_call.1} parent=5 // pred_fallthru
        _
    $region6: #{tpu_custom_call.1} parent=1 // loop_footer
      %s28 = sadd.s32 1, %s24
    $region7: #{tpu_custom_call.1} parent=1 // loop_footer_branch
      %23 = sbr.rel target = $region3
    $region8: #{tpu_custom_call.1} parent=1 // loop_exit
      _
    %826 = vsyncpa [#allocation3], 1
    %s827 = scalar_lea.sflag [#allocation3], 1
    %828 = vsyncpa %s827, 1
    %829 = vsyncpa [#allocation6], 1
    %830 = vsyncpa [#allocation4], 1
    %s831 = scalar_lea.sflag [#allocation4], 1
    %832 = vsyncpa %s831, 1
    %833 = vsyncpa [#allocation10], 1
    %s834 = scalar_lea.sflag [#allocation10], 1
    %835 = vsyncpa %s834, 1

</llo_original>
